<compile_context>
chip_gen: v6e
topology: v6e:2x2x1
jax: 0.10.0
libtpu: 0.0.40
codegen_flags: <defaults>
</compile_context>

<pallas_src>
import functools

import jax
import jax.numpy as jnp
from jax.experimental import pallas as pl
from jax.experimental.pallas import tpu as pltpu

LN_EPS = 1e-5  # PyTorch nn.LayerNorm default


def _round_up(n, m):
    return (n + m - 1) // m * m


def ffn_zipformer_kernel(x_ref, g_ref, beta_ref, w1_ref, b1_ref, w2_ref, b2_ref,
                         o_ref, ln_ref, acc_ref):
    """Grid = (row tiles, d_ff tiles); k (reduction over d_ff chunks) is innermost."""
    k = pl.program_id(1)

    # ---- LayerNorm (f32 statistics), once per row tile, cached in the compute dtype ----
    @pl.when(k == 0)
    def _():
        x = x_ref[...].astype(jnp.float32)                     # (tm, d_model)
        mean = jnp.mean(x, axis=-1, keepdims=True)
        xc = x - mean
        var = jnp.mean(xc * xc, axis=-1, keepdims=True)        # two-pass: numerically stable
        xn = xc * jax.lax.rsqrt(var + LN_EPS)
        h = xn * g_ref[...].astype(jnp.float32) + beta_ref[...].astype(jnp.float32)
        ln_ref[...] = h.astype(ln_ref.dtype)
        acc_ref[...] = jnp.zeros_like(acc_ref)

    # ---- linear1 chunk (MXU in weight dtype, f32 accumulation) + Swish ----
    h1 = jnp.dot(ln_ref[...], w1_ref[...], preferred_element_type=jnp.float32)
    h1 = h1 + b1_ref[...].astype(jnp.float32)
    h1 = h1 * jax.nn.sigmoid(h1)                               # Swish (VPU + EUP)
    # dropout1: identity (eval mode)

    # ---- linear2 chunk: accumulate partial products over d_ff ----
    acc_ref[...] += jnp.dot(h1.astype(w2_ref.dtype), w2_ref[...],
                            preferred_element_type=jnp.float32)

    @pl.when(k == pl.num_programs(1) - 1)
    def _():
        out = acc_ref[...] + b2_ref[...].astype(jnp.float32)
        # dropout2: identity (eval mode)
        o_ref[...] = out.astype(o_ref.dtype)


@functools.partial(jax.jit, static_argnames=("tm", "tk", "force_bf16_matmul"))
def feed_forward_zipformer(x, gamma, beta, w1, b1, w2, b2, *,
                           tm=512, tk=None, force_bf16_matmul=True):
    """x: (batch, seq, d_model). Weights pre-transposed: w1 (d_model, d_ff), w2 (d_ff, d_model)."""
    batch, seq, d_model = x.shape
    d_ff = w1.shape[1]
    T = batch * seq
    assert tm % 8 == 0, "row tile must be a multiple of 8 sublanes"

    # MXU path: bf16 weights (f32 matmul would run the MXU multi-pass and double DMA).
    if force_bf16_matmul and w1.dtype == jnp.float32:
        w1 = w1.astype(jnp.bfloat16)
        w2 = w2.astype(jnp.bfloat16)
    compute_dtype = w1.dtype

    isz = lambda d: jnp.dtype(d).itemsize
    x_isz, o_isz, w_isz, c_isz = isz(x.dtype), isz(x.dtype), isz(w1.dtype), isz(compute_dtype)
    p_isz, b1_isz, b2_isz = isz(gamma.dtype), isz(b1.dtype), isz(b2.dtype)

    # ---- generation-aware VMEM budget (~75% physical: ~48 MiB v7x, ~96 MiB v5e/v6e) ----
    try:
        vmem_cap = int(pltpu.get_tpu_info().vmem_capacity_bytes)
    except Exception:
        vmem_cap = 64 * 2**20            # conservative (v7x-sized) fallback
    vmem_budget = vmem_cap * 3 // 4

    def need_bytes(tm_, tk_):
        nkb = 1 if tk_ == d_ff else 2    # weight blocks: single-buffered when grid-invariant
        return int(
            2 * tm_ * d_model * (x_isz + o_isz)                  # double-buffered x / out tiles
            + nkb * (2 * d_model * tk_ * w_isz + tk_ * b1_isz)   # w1 / w2 / b1 blocks
            + 2 * d_model * p_isz + d_model * b2_isz             # gamma / beta / b2 (1 buffer)
            + tm_ * d_model * (c_isz + 4)                        # LN cache + f32 accumulator
            + tm_ * tk_ * (4 + c_isz)                            # h1 f32 + bf16 cast copy
            + tm_ * d_model * 8                                  # x f32 copy + partial product
        )

    # ---- tile selection ----
    tm_eff = min(tm, _round_up(T, 8))
    if T >= 32:
        # keep >=4 row tiles so the "parallel" axis can feed both v7x TensorCores with
        # >=2 pipelined steps each (also keeps input/output DMA overlapped).
        tm_eff = min(tm_eff, _round_up(pl.cdiv(T, 4), 8))
    tm_eff = max(tm_eff, 8)

    if tk is None:
        tk_eff = d_ff
        # tile d_ff only when the fully-resident footprint exceeds the VMEM budget
        while (need_bytes(tm_eff, tk_eff) > vmem_budget and tk_eff % 2 == 0
               and tk_eff // 2 >= 256 and (tk_eff // 2) % 128 == 0):
            tk_eff //= 2
    else:
        tk_eff = tk
    assert d_ff % tk_eff == 0, "d_ff tile must divide d_ff"
    assert tk_eff == d_ff or tk_eff % 128 == 0, "partial d_ff tile must be lane aligned"

    while need_bytes(tm_eff, tk_eff) > vmem_budget and tm_eff >= 16:
        tm_eff = max(_round_up(tm_eff // 2, 8), 8)

    T_pad = _round_up(T, tm_eff)
    n_rows = T_pad // tm_eff
    n_k = d_ff // tk_eff

    x2d = x.reshape(T, d_model)
    if T_pad != T:
        x2d = jnp.pad(x2d, ((0, T_pad - T), (0, 0)))

    # keep 1D params as (1, dim) so they map cleanly onto (sublane, lane)
    gamma2 = gamma.reshape(1, d_model)
    beta2 = beta.reshape(1, d_model)
    b1_2 = b1.reshape(1, d_ff)
    b2_2 = b2.reshape(1, d_model)

    single = pl.Buffered(1)              # grid-invariant operands: no double-buffering
    w_mode = single if n_k == 1 else None

    def spec(shape, index_map, mode):
        if mode is None:
            return pl.BlockSpec(shape, index_map)
        return pl.BlockSpec(shape, index_map, pipeline_mode=mode)

    vmem_limit = int(min(vmem_budget,
                         max(need_bytes(tm_eff, tk_eff) * 5 // 4 + 2 * 2**20, 16 * 2**20)))

    cost = pl.CostEstimate(
        flops=4 * T_pad * d_model * d_ff,
        transcendentals=T_pad * d_ff + T_pad,
        bytes_accessed=(
            T_pad * d_model * (x_isz + o_isz)
            + 2 * d_model * d_ff * w_isz
            + 2 * d_model * p_isz + d_ff * b1_isz + d_model * b2_isz
        ),
    )

    out2d = pl.pallas_call(
        ffn_zipformer_kernel,
        out_shape=jax.ShapeDtypeStruct((T_pad, d_model), x.dtype),
        grid_spec=pltpu.PrefetchScalarGridSpec(
            num_scalar_prefetch=0,
            grid=(n_rows, n_k),
            in_specs=[
                spec((tm_eff, d_model), lambda i, k: (i, 0), None),      # x tile
                spec((1, d_model), lambda i, k: (0, 0), single),         # layer_norm.weight
                spec((1, d_model), lambda i, k: (0, 0), single),         # layer_norm.bias
                spec((d_model, tk_eff), lambda i, k: (0, k), w_mode),    # linear1.weight^T
                spec((1, tk_eff), lambda i, k: (0, k), w_mode),          # linear1.bias
                spec((tk_eff, d_model), lambda i, k: (k, 0), w_mode),    # linear2.weight^T
                spec((1, d_model), lambda i, k: (0, 0), single),         # linear2.bias
            ],
            out_specs=pl.BlockSpec((tm_eff, d_model), lambda i, k: (i, 0)),
            scratch_shapes=[
                pltpu.VMEM((tm_eff, d_model), compute_dtype),   # LayerNorm cache
                pltpu.VMEM((tm_eff, d_model), jnp.float32),     # linear2 accumulator
            ],
        ),
        compiler_params=pltpu.CompilerParams(
            dimension_semantics=("parallel", "arbitrary"),
            vmem_limit_bytes=vmem_limit,
        ),
        cost_estimate=cost,
    )(x2d, gamma2, beta2, w1, b1_2, w2, b2_2)

    if T_pad != T:
        out2d = out2d[:T]
    return out2d.reshape(batch, seq, d_model)


def _reference(x, gamma, beta, w1, b1, w2, b2):
    xf = x.astype(jnp.float32)
    mean = jnp.mean(xf, axis=-1, keepdims=True)
    var = jnp.mean((xf - mean) ** 2, axis=-1, keepdims=True)
    xn = (xf - mean) * jax.lax.rsqrt(var + LN_EPS)
    h = xn * gamma.astype(jnp.float32) + beta.astype(jnp.float32)
    h1 = h @ w1.astype(jnp.float32) + b1.astype(jnp.float32)
    h1 = h1 * jax.nn.sigmoid(h1)
    out = h1 @ w2.astype(jnp.float32) + b2.astype(jnp.float32)
    return out


if __name__ == "__main__":
    # Small, lane-dense demo shapes; T=120 also exercises the row-padding path.
    batch, seq, d_model, d_ff = 2, 60, 128, 256

    key = jax.random.PRNGKey(0)
    kx, kw1, kb1, kw2, kb2, kg, kbt = jax.random.split(key, 7)

    x = jax.random.normal(kx, (batch, seq, d_model), dtype=jnp.float32)

    # deterministic synthetic parameters (shapes from the module __init__)
    gamma = 1.0 + 0.1 * jax.random.normal(kg, (d_model,), jnp.float32)  # LayerNorm weight
    beta = 0.1 * jax.random.normal(kbt, (d_model,), jnp.float32)        # LayerNorm bias
    # nn.Linear stores (out, in); weights are pre-transposed to (in, out) for the kernel
    w1 = jax.random.normal(kw1, (d_model, d_ff), jnp.float32) * (1.0 / d_model ** 0.5)
    b1 = 0.02 * jax.random.normal(kb1, (d_ff,), jnp.float32)
    w2 = jax.random.normal(kw2, (d_ff, d_model), jnp.float32) * (1.0 / d_ff ** 0.5)
    b2 = 0.02 * jax.random.normal(kb2, (d_model,), jnp.float32)

    ref = _reference(x, gamma, beta, w1, b1, w2, b2)

    # default path: f32 activations streamed, weights force-cast to bf16 for the MXU
    out = jax.block_until_ready(feed_forward_zipformer(x, gamma, beta, w1, b1, w2, b2))
    assert out.shape == (batch, seq, d_model)
    assert jnp.allclose(out.astype(jnp.float32), ref, atol=5e-2, rtol=5e-2), \
        "default path mismatch vs reference"

    # d_ff-tiled path (k axis > 1): exercises the accumulator / pl.when init-finalize
    out_k = jax.block_until_ready(
        feed_forward_zipformer(x, gamma, beta, w1, b1, w2, b2, tk=128))
    assert jnp.allclose(out_k.astype(jnp.float32), ref, atol=5e-2, rtol=5e-2), \
        "d_ff-tiled path mismatch vs reference"

    # mem-bound fast path: bf16 activations end-to-end (x in bf16, output in bf16)
    out_bf16 = jax.block_until_ready(
        feed_forward_zipformer(x.astype(jnp.bfloat16), gamma, beta,
                               w1.astype(jnp.bfloat16), b1,
                               w2.astype(jnp.bfloat16), b2))
    assert out_bf16.dtype == jnp.bfloat16
    assert jnp.allclose(out_bf16.astype(jnp.float32), ref, atol=2e-1, rtol=2e-1), \
        "bf16 path mismatch vs reference"

    print("KERNEL_OK")
</pallas_src>

<mosaic_0001>
module attributes {stable_mosaic.version = 11 : i64} {
  func.func @ffn_zipformer_kernel(%arg0: i32, %arg1: i32, %arg2: memref<32x128xf32, #tpu.memory_space<vmem>>, %arg3: memref<1x128xf32, #tpu.memory_space<vmem>>, %arg4: memref<1x128xf32, #tpu.memory_space<vmem>>, %arg5: memref<128x256xbf16, #tpu.memory_space<vmem>>, %arg6: memref<1x256xf32, #tpu.memory_space<vmem>>, %arg7: memref<256x128xbf16, #tpu.memory_space<vmem>>, %arg8: memref<1x128xf32, #tpu.memory_space<vmem>>, %arg9: memref<32x128xf32, #tpu.memory_space<vmem>>, %arg10: memref<32x128xbf16, #tpu.memory_space<vmem>>, %arg11: memref<32x128xf32, #tpu.memory_space<vmem>>) attributes {dimension_semantics = [#tpu.dimension_semantics<parallel>, #tpu.dimension_semantics<arbitrary>], iteration_bounds = array<i64: 4, 1>, scalar_prefetch = 0 : i64, scratch_operands = 2 : i64, tpu.core_type = #tpu.core_type<tc>, window_params = [{transform_indices = @transform_0, window_bounds = array<i64: 32, 128>}, {pipeline_mode = #tpu.pipeline_mode<synchronous>, transform_indices = @transform_1, window_bounds = array<i64: 1, 128>}, {pipeline_mode = #tpu.pipeline_mode<synchronous>, transform_indices = @transform_2, window_bounds = array<i64: 1, 128>}, {pipeline_mode = #tpu.pipeline_mode<synchronous>, transform_indices = @transform_3, window_bounds = array<i64: 128, 256>}, {pipeline_mode = #tpu.pipeline_mode<synchronous>, transform_indices = @transform_4, window_bounds = array<i64: 1, 256>}, {pipeline_mode = #tpu.pipeline_mode<synchronous>, transform_indices = @transform_5, window_bounds = array<i64: 256, 128>}, {pipeline_mode = #tpu.pipeline_mode<synchronous>, transform_indices = @transform_6, window_bounds = array<i64: 1, 128>}, {transform_indices = @transform_7, window_bounds = array<i64: 32, 128>}]} {
    %c0_i32 = arith.constant 0 : i32
    %0 = arith.cmpi eq, %arg1, %c0_i32 : i32
    %1 = arith.extui %0 : i1 to i32
    %c0_i32_0 = arith.constant 0 : i32
    %2 = arith.cmpi ne, %1, %c0_i32_0 : i32
    scf.if %2 {
      %c0_16 = arith.constant 0 : index
      %c0_17 = arith.constant 0 : index
      %24 = vector.load %arg2[%c0_16, %c0_17] : memref<32x128xf32, #tpu.memory_space<vmem>>, vector<32x128xf32>
      %cst_18 = arith.constant dense<0.000000e+00> : vector<32xf32>
      %25 = vector.multi_reduction <add>, %24, %cst_18 [1] : vector<32x128xf32> to vector<32xf32>
      %26 = vector.shape_cast %25 : vector<32xf32> to vector<32x1xf32>
      %cst_19 = arith.constant 1.280000e+02 : f32
      %27 = vector.broadcast %cst_19 : f32 to vector<32x1xf32>
      %28 = arith.divf %26, %27 : vector<32x1xf32>
      %29 = vector.broadcast %28 : vector<32x1xf32> to vector<32x128xf32>
      %30 = arith.subf %24, %29 : vector<32x128xf32>
      %31 = arith.mulf %30, %30 : vector<32x128xf32>
      %cst_20 = arith.constant dense<0.000000e+00> : vector<32xf32>
      %32 = vector.multi_reduction <add>, %31, %cst_20 [1] : vector<32x128xf32> to vector<32xf32>
      %33 = vector.shape_cast %32 : vector<32xf32> to vector<32x1xf32>
      %cst_21 = arith.constant 1.280000e+02 : f32
      %34 = vector.broadcast %cst_21 : f32 to vector<32x1xf32>
      %35 = arith.divf %33, %34 : vector<32x1xf32>
      %cst_22 = arith.constant 9.99999974E-6 : f32
      %36 = vector.broadcast %cst_22 : f32 to vector<32x1xf32>
      %37 = arith.addf %35, %36 : vector<32x1xf32>
      %38 = math.rsqrt %37 : vector<32x1xf32>
      %39 = vector.broadcast %38 : vector<32x1xf32> to vector<32x128xf32>
      %40 = arith.mulf %30, %39 : vector<32x128xf32>
      %c0_23 = arith.constant 0 : index
      %c0_24 = arith.constant 0 : index
      %41 = vector.load %arg3[%c0_23, %c0_24] : memref<1x128xf32, #tpu.memory_space<vmem>>, vector<1x128xf32>
      %42 = vector.broadcast %41 : vector<1x128xf32> to vector<32x128xf32>
      %43 = arith.mulf %40, %42 : vector<32x128xf32>
      %c0_25 = arith.constant 0 : index
      %c0_26 = arith.constant 0 : index
      %44 = vector.load %arg4[%c0_25, %c0_26] : memref<1x128xf32, #tpu.memory_space<vmem>>, vector<1x128xf32>
      %45 = vector.broadcast %44 : vector<1x128xf32> to vector<32x128xf32>
      %46 = arith.addf %43, %45 : vector<32x128xf32>
      %47 = arith.truncf %46 : vector<32x128xf32> to vector<32x128xbf16>
      %c0_27 = arith.constant 0 : index
      %c0_28 = arith.constant 0 : index
      %48 = vector.load %arg10[%c0_27, %c0_28] : memref<32x128xbf16, #tpu.memory_space<vmem>>, vector<32x128xbf16>
      tpu.vector_store %arg10[%c0_27, %c0_28], %47 {strides = array<i32>} : memref<32x128xbf16, #tpu.memory_space<vmem>>, vector<32x128xbf16>,
      %cst_29 = arith.constant 0.000000e+00 : f32
      %49 = vector.broadcast %cst_29 : f32 to vector<32x128xf32>
      %c0_30 = arith.constant 0 : index
      %c0_31 = arith.constant 0 : index
      %50 = vector.load %arg11[%c0_30, %c0_31] : memref<32x128xf32, #tpu.memory_space<vmem>>, vector<32x128xf32>
      tpu.vector_store %arg11[%c0_30, %c0_31], %49 {strides = array<i32>} : memref<32x128xf32, #tpu.memory_space<vmem>>, vector<32x128xf32>,
    } else {
    }
    %c0 = arith.constant 0 : index
    %c0_1 = arith.constant 0 : index
    %3 = vector.load %arg10[%c0, %c0_1] : memref<32x128xbf16, #tpu.memory_space<vmem>>, vector<32x128xbf16>
    %c0_2 = arith.constant 0 : index
    %c0_3 = arith.constant 0 : index
    %4 = vector.load %arg5[%c0_2, %c0_3] : memref<128x256xbf16, #tpu.memory_space<vmem>>, vector<128x256xbf16>
    %cst = arith.constant dense<0.000000e+00> : vector<32x256xf32>
    %5 = tpu.matmul %3, %4, %cst {dimension_numbers = #tpu.dot_dimension_numbers<[1], [0], [0], [1], [0, 0, 1, 1], [], []>} : vector<32x128xbf16>, vector<128x256xbf16>, vector<32x256xf32> -> vector<32x256xf32>
    %c0_4 = arith.constant 0 : index
    %c0_5 = arith.constant 0 : index
    %6 = vector.load %arg6[%c0_4, %c0_5] : memref<1x256xf32, #tpu.memory_space<vmem>>, vector<1x256xf32>
    %7 = vector.broadcast %6 : vector<1x256xf32> to vector<32x256xf32>
    %8 = arith.addf %5, %7 : vector<32x256xf32>
    %9 = arith.negf %8 : vector<32x256xf32>
    %10 = math.exp %9 : vector<32x256xf32>
    %cst_6 = arith.constant 1.000000e+00 : f32
    %11 = vector.broadcast %cst_6 : f32 to vector<32x256xf32>
    %12 = arith.addf %11, %10 : vector<32x256xf32>
    %13 = arith.divf %11, %12 : vector<32x256xf32>
    %14 = arith.mulf %8, %13 : vector<32x256xf32>
    %c0_7 = arith.constant 0 : index
    %c0_8 = arith.constant 0 : index
    %15 = vector.load %arg11[%c0_7, %c0_8] : memref<32x128xf32, #tpu.memory_space<vmem>>, vector<32x128xf32>
    %16 = arith.truncf %14 : vector<32x256xf32> to vector<32x256xbf16>
    %c0_9 = arith.constant 0 : index
    %c0_10 = arith.constant 0 : index
    %17 = vector.load %arg7[%c0_9, %c0_10] : memref<256x128xbf16, #tpu.memory_space<vmem>>, vector<256x128xbf16>
    %cst_11 = arith.constant dense<0.000000e+00> : vector<32x128xf32>
    %18 = tpu.matmul %16, %17, %cst_11 {dimension_numbers = #tpu.dot_dimension_numbers<[1], [0], [0], [1], [0, 0, 1, 1], [], []>} : vector<32x256xbf16>, vector<256x128xbf16>, vector<32x128xf32> -> vector<32x128xf32>
    %19 = arith.addf %15, %18 : vector<32x128xf32>
    %c0_12 = arith.constant 0 : index
    %c0_13 = arith.constant 0 : index
    %20 = vector.load %arg11[%c0_12, %c0_13] : memref<32x128xf32, #tpu.memory_space<vmem>>, vector<32x128xf32>
    tpu.vector_store %arg11[%c0_12, %c0_13], %19 {strides = array<i32>} : memref<32x128xf32, #tpu.memory_space<vmem>>, vector<32x128xf32>,
    %c0_i32_14 = arith.constant 0 : i32
    %21 = arith.cmpi eq, %arg1, %c0_i32_14 : i32
    %22 = arith.extui %21 : i1 to i32
    %c0_i32_15 = arith.constant 0 : i32
    %23 = arith.cmpi ne, %22, %c0_i32_15 : i32
    scf.if %23 {
      %c0_16 = arith.constant 0 : index
      %c0_17 = arith.constant 0 : index
      %24 = vector.load %arg11[%c0_16, %c0_17] : memref<32x128xf32, #tpu.memory_space<vmem>>, vector<32x128xf32>
      %c0_18 = arith.constant 0 : index
      %c0_19 = arith.constant 0 : index
      %25 = vector.load %arg8[%c0_18, %c0_19] : memref<1x128xf32, #tpu.memory_space<vmem>>, vector<1x128xf32>
      %26 = vector.broadcast %25 : vector<1x128xf32> to vector<32x128xf32>
      %27 = arith.addf %24, %26 : vector<32x128xf32>
      %c0_20 = arith.constant 0 : index
      %c0_21 = arith.constant 0 : index
      %28 = vector.load %arg9[%c0_20, %c0_21] : memref<32x128xf32, #tpu.memory_space<vmem>>, vector<32x128xf32>
      tpu.vector_store %arg9[%c0_20, %c0_21], %27 {strides = array<i32>} : memref<32x128xf32, #tpu.memory_space<vmem>>, vector<32x128xf32>,
    } else {
    }
    return
  }
  func.func @transform_0(%arg0: i32, %arg1: i32) -> (i32, i32) {
    %c0_i32 = arith.constant 0 : i32
    %c0_i32_0 = arith.constant 0 : i32
    return %arg0, %c0_i32 : i32, i32
  }
  func.func @transform_1(%arg0: i32, %arg1: i32) -> (i32, i32) {
    %c0_i32 = arith.constant 0 : i32
    %c0_i32_0 = arith.constant 0 : i32
    %c0_i32_1 = arith.constant 0 : i32
    return %c0_i32, %c0_i32_0 : i32, i32
  }
  func.func @transform_2(%arg0: i32, %arg1: i32) -> (i32, i32) {
    %c0_i32 = arith.constant 0 : i32
    %c0_i32_0 = arith.constant 0 : i32
    %c0_i32_1 = arith.constant 0 : i32
    return %c0_i32, %c0_i32_0 : i32, i32
  }
  func.func @transform_3(%arg0: i32, %arg1: i32) -> (i32, i32) {
    %c0_i32 = arith.constant 0 : i32
    %c0_i32_0 = arith.constant 0 : i32
    return %c0_i32, %arg1 : i32, i32
  }
  func.func @transform_4(%arg0: i32, %arg1: i32) -> (i32, i32) {
    %c0_i32 = arith.constant 0 : i32
    %c0_i32_0 = arith.constant 0 : i32
    return %c0_i32, %arg1 : i32, i32
  }
  func.func @transform_5(%arg0: i32, %arg1: i32) -> (i32, i32) {
    %c0_i32 = arith.constant 0 : i32
    %c0_i32_0 = arith.constant 0 : i32
    return %arg1, %c0_i32 : i32, i32
  }
  func.func @transform_6(%arg0: i32, %arg1: i32) -> (i32, i32) {
    %c0_i32 = arith.constant 0 : i32
    %c0_i32_0 = arith.constant 0 : i32
    %c0_i32_1 = arith.constant 0 : i32
    return %c0_i32, %c0_i32_0 : i32, i32
  }
  func.func @transform_7(%arg0: i32, %arg1: i32) -> (i32, i32) {
    %c0_i32 = arith.constant 0 : i32
    %c0_i32_0 = arith.constant 0 : i32
    return %arg0, %c0_i32 : i32, i32
  }
}

</mosaic_0001>

<llo_original>
// kernel: feed_forward_zipformer.1
$region0: #{feed_forward_zipformer.1}
  #allocation0 [shape = 'u32[]', space=smem, size = 0x4, offset = 0x4, fixed_abs, tag = 'smem constant byte address 0x4 - core index']
  #allocation1 [shape = 'u32[144,128]{1,0:T(1,128)}', space=vmem, size = 0x12000, scoped, tag = 'internal scratch']
  #allocation2 [shape = 'bf16[32,128]{1,0:T(8,128)(2,1)}', space=vmem, size = 0x2000, scoped, tag = 'scratch operand']
  #allocation3 [shape = 'f32[32,128]{1,0:T(8,128)}', space=vmem, size = 0x4000, scoped, tag = 'scratch operand']
  %s0 = inlined_call_operand.vmem [shape: f32[128,128], index: 0, kind: input, shape index: {}]
  %s1 = inlined_call_operand.vmem [shape: f32[1,128], index: 1, kind: input, shape index: {}]
  %s2 = inlined_call_operand.vmem [shape: f32[1,128], index: 2, kind: input, shape index: {}]
  %s3 = inlined_call_operand.vmem [shape: bf16[128,256], index: 3, kind: input, shape index: {}]
  %s4 = inlined_call_operand.vmem [shape: f32[1,256], index: 4, kind: input, shape index: {}]
  %s5 = inlined_call_operand.vmem [shape: bf16[256,128], index: 5, kind: input, shape index: {}]
  %s6 = inlined_call_operand.vmem [shape: f32[1,128], index: 6, kind: input, shape index: {}]
  %s7 = inlined_call_operand.vmem [shape: f32[128,128], index: 7, kind: output, shape index: {}]
  %s8 = sld [smem:[#allocation0]]
  $region69: #{feed_forward_zipformer.1} parent=0
    _
  %s10 = ssub.s32 1, %s8
  %s11 = scalar_select 0, %s10, %s8
  loop: start=0, step=1, limit=6
  $region2: #{feed_forward_zipformer.1} parent=0 // loop_pre_header
    _
  $region3: #{feed_forward_zipformer.1} parent=0 // loop_header
    %s13 = sphi 0, %s17
    %p14 = scmp.ge.s32.totalorder %s13, 6
    %s20 = sphi 0, %s32
    %s21 = sphi 0, %s28
    %s22 = sphi 0, %s20
    %s23 = sphi 0, %s21
    %s24 = sphi 0, %s22
    %s25 = sphi 0, %s23
    %s35 = sphi 0, %s37
    %s38 = sphi 0, %s35
    %s39 = sphi 0, %s38
    %s55 = sphi 0, %s39
    %s59 = sphi 0, %s59
    %s61 = sphi 0, %s59
    %s62 = sphi 0, %s61
    %s76 = sphi 0, %s62
    %s80 = sphi 0, %s80
    %s82 = sphi 0, %s80
    %s83 = sphi 0, %s82
    %s97 = sphi 0, %s83
    %s103 = sphi 0, %s105
    %s106 = sphi 0, %s103
    %s107 = sphi 0, %s106
    %s123 = sphi 0, %s107
    %s129 = sphi 0, %s131
    %s132 = sphi 0, %s129
    %s133 = sphi 0, %s132
    %s149 = sphi 0, %s133
    %s155 = sphi 0, %s157
    %s158 = sphi 0, %s155
    %s159 = sphi 0, %s158
    %s175 = sphi 0, %s159
    %s179 = sphi 0, %s179
    %s181 = sphi 0, %s179
    %s182 = sphi 0, %s181
    %s196 = sphi 0, %s182
    %s202 = sphi 0, %s204
    %s205 = sphi 0, %s202
    %s206 = sphi 0, %s205
    %s222 = sphi 0, %s206
  $region4: #{feed_forward_zipformer.1} parent=0 // loop_header_branch
    %16 = sbr.rel (%p14) target = $region8
  $region5: #{feed_forward_zipformer.1} parent=0 // loop_body
    %s18 = ssub.s32 %s13, 1
    %s19 = ssub.s32 %s13, 2
    %s26 = sadd.s32 1, %s21
    %p27 = scmp.ge.s32.totalorder %s26, 1
    %s28 = scalar_select %p27, 0, %s26
    %s29 = sadd.s32 1, %s20
    %s30 = scalar_select %p27, %s29, %s20
    %p31 = scmp.ge.s32.totalorder %s30, 4
    %s32 = scalar_select %p31, 0, %s30
    %s33 = ssub.s32 %s20, %s32
    %p34 = scmp.eq.s32.totalorder %s33, 0
    %s36 = sadd.s32 %s35, 1
    %s37 = scalar_select %p34, %s35, %s36
    %p40 = pneg %p34
    %p41 = scmp.eq.s32.totalorder %s13, 3
    %p42 = por %p40, %p41
    %p43 = scmp.ne.s32.totalorder %s35, %s38
    %p44 = scmp.eq.s32.totalorder %s13, 0
    %p45 = por %p43, %p44
    %p46 = scmp.ne.s32.totalorder %s35, %s38
    %p47 = scmp.eq.s32.totalorder %s18, 3
    %p48 = por %p46, %p47
    %p49 = scmp.ne.s32.totalorder %s38, %s39
    %p50 = scmp.eq.s32.totalorder %s18, 0
    %p51 = por %p49, %p50
    %p52 = scmp.ne.s32.totalorder %s38, %s39
    %p53 = scmp.eq.s32.totalorder %s19, 3
    %p54 = por %p52, %p53
    %p56 = scmp.ne.s32.totalorder %s39, %s55
    %p57 = scmp.eq.s32.totalorder %s19, 0
    %p58 = por %p56, %p57
    %s60 = sadd.s32 %s59, 1
    %p63 = scmp.eq.s32.totalorder %s13, 3
    %p64 = scmp.ne.s32.totalorder %s59, %s61
    %p65 = scmp.eq.s32.totalorder %s13, 0
    %p66 = por %p64, %p65
    %p67 = scmp.ne.s32.totalorder %s59, %s61
    %p68 = scmp.eq.s32.totalorder %s18, 3
    %p69 = por %p67, %p68
    %p70 = scmp.ne.s32.totalorder %s61, %s62
    %p71 = scmp.eq.s32.totalorder %s18, 0
    %p72 = por %p70, %p71
    %p73 = scmp.ne.s32.totalorder %s61, %s62
    %p74 = scmp.eq.s32.totalorder %s19, 3
    %p75 = por %p73, %p74
    %p77 = scmp.ne.s32.totalorder %s62, %s76
    %p78 = scmp.eq.s32.totalorder %s19, 0
    %p79 = por %p77, %p78
    %s81 = sadd.s32 %s80, 1
    %p84 = scmp.eq.s32.totalorder %s13, 3
    %p85 = scmp.ne.s32.totalorder %s80, %s82
    %p86 = scmp.eq.s32.totalorder %s13, 0
    %p87 = por %p85, %p86
    %p88 = scmp.ne.s32.totalorder %s80, %s82
    %p89 = scmp.eq.s32.totalorder %s18, 3
    %p90 = por %p88, %p89
    %p91 = scmp.ne.s32.totalorder %s82, %s83
    %p92 = scmp.eq.s32.totalorder %s18, 0
    %p93 = por %p91, %p92
    %p94 = scmp.ne.s32.totalorder %s82, %s83
    %p95 = scmp.eq.s32.totalorder %s19, 3
    %p96 = por %p94, %p95
    %p98 = scmp.ne.s32.totalorder %s83, %s97
    %p99 = scmp.eq.s32.totalorder %s19, 0
    %p100 = por %p98, %p99
    %s101 = ssub.s32 %s21, %s28
    %p102 = scmp.eq.s32.totalorder %s101, 0
    %s104 = sadd.s32 %s103, 1
    %s105 = scalar_select %p102, %s103, %s104
    %p108 = pneg %p102
    %p109 = scmp.eq.s32.totalorder %s13, 3
    %p110 = por %p108, %p109
    %p111 = scmp.ne.s32.totalorder %s103, %s106
    %p112 = scmp.eq.s32.totalorder %s13, 0
    %p113 = por %p111, %p112
    %p114 = scmp.ne.s32.totalorder %s103, %s106
    %p115 = scmp.eq.s32.totalorder %s18, 3
    %p116 = por %p114, %p115
    %p117 = scmp.ne.s32.totalorder %s106, %s107
    %p118 = scmp.eq.s32.totalorder %s18, 0
    %p119 = por %p117, %p118
    %p120 = scmp.ne.s32.totalorder %s106, %s107
    %p121 = scmp.eq.s32.totalorder %s19, 3
    %p122 = por %p120, %p121
    %p124 = scmp.ne.s32.totalorder %s107, %s123
    %p125 = scmp.eq.s32.totalorder %s19, 0
    %p126 = por %p124, %p125
    %s127 = ssub.s32 %s21, %s28
    %p128 = scmp.eq.s32.totalorder %s127, 0
    %s130 = sadd.s32 %s129, 1
    %s131 = scalar_select %p128, %s129, %s130
    %p134 = pneg %p128
    %p135 = scmp.eq.s32.totalorder %s13, 3
    %p136 = por %p134, %p135
    %p137 = scmp.ne.s32.totalorder %s129, %s132
    %p138 = scmp.eq.s32.totalorder %s13, 0
    %p139 = por %p137, %p138
    %p140 = scmp.ne.s32.totalorder %s129, %s132
    %p141 = scmp.eq.s32.totalorder %s18, 3
    %p142 = por %p140, %p141
    %p143 = scmp.ne.s32.totalorder %s132, %s133
    %p144 = scmp.eq.s32.totalorder %s18, 0
    %p145 = por %p143, %p144
    %p146 = scmp.ne.s32.totalorder %s132, %s133
    %p147 = scmp.eq.s32.totalorder %s19, 3
    %p148 = por %p146, %p147
    %p150 = scmp.ne.s32.totalorder %s133, %s149
    %p151 = scmp.eq.s32.totalorder %s19, 0
    %p152 = por %p150, %p151
    %s153 = ssub.s32 %s21, %s28
    %p154 = scmp.eq.s32.totalorder %s153, 0
    %s156 = sadd.s32 %s155, 1
    %s157 = scalar_select %p154, %s155, %s156
    %p160 = pneg %p154
    %p161 = scmp.eq.s32.totalorder %s13, 3
    %p162 = por %p160, %p161
    %p163 = scmp.ne.s32.totalorder %s155, %s158
    %p164 = scmp.eq.s32.totalorder %s13, 0
    %p165 = por %p163, %p164
    %p166 = scmp.ne.s32.totalorder %s155, %s158
    %p167 = scmp.eq.s32.totalorder %s18, 3
    %p168 = por %p166, %p167
    %p169 = scmp.ne.s32.totalorder %s158, %s159
    %p170 = scmp.eq.s32.totalorder %s18, 0
    %p171 = por %p169, %p170
    %p172 = scmp.ne.s32.totalorder %s158, %s159
    %p173 = scmp.eq.s32.totalorder %s19, 3
    %p174 = por %p172, %p173
    %p176 = scmp.ne.s32.totalorder %s159, %s175
    %p177 = scmp.eq.s32.totalorder %s19, 0
    %p178 = por %p176, %p177
    %s180 = sadd.s32 %s179, 1
    %p183 = scmp.eq.s32.totalorder %s13, 3
    %p184 = scmp.ne.s32.totalorder %s179, %s181
    %p185 = scmp.eq.s32.totalorder %s13, 0
    %p186 = por %p184, %p185
    %p187 = scmp.ne.s32.totalorder %s179, %s181
    %p188 = scmp.eq.s32.totalorder %s18, 3
    %p189 = por %p187, %p188
    %p190 = scmp.ne.s32.totalorder %s181, %s182
    %p191 = scmp.eq.s32.totalorder %s18, 0
    %p192 = por %p190, %p191
    %p193 = scmp.ne.s32.totalorder %s181, %s182
    %p194 = scmp.eq.s32.totalorder %s19, 3
    %p195 = por %p193, %p194
    %p197 = scmp.ne.s32.totalorder %s182, %s196
    %p198 = scmp.eq.s32.totalorder %s19, 0
    %p199 = por %p197, %p198
    %s200 = ssub.s32 %s20, %s32
    %p201 = scmp.eq.s32.totalorder %s200, 0
    %s203 = sadd.s32 %s202, 1
    %s204 = scalar_select %p201, %s202, %s203
    %p207 = pneg %p201
    %p208 = scmp.eq.s32.totalorder %s13, 3
    %p209 = por %p207, %p208
    %p210 = scmp.ne.s32.totalorder %s202, %s205
    %p211 = scmp.eq.s32.totalorder %s13, 0
    %p212 = por %p210, %p211
    %p213 = scmp.ne.s32.totalorder %s202, %s205
    %p214 = scmp.eq.s32.totalorder %s18, 3
    %p215 = por %p213, %p214
    %p216 = scmp.ne.s32.totalorder %s205, %s206
    %p217 = scmp.eq.s32.totalorder %s18, 0
    %p218 = por %p216, %p217
    %p219 = scmp.ne.s32.totalorder %s205, %s206
    %p220 = scmp.eq.s32.totalorder %s19, 3
    %p221 = por %p219, %p220
    %p223 = scmp.ne.s32.totalorder %s206, %s222
    %p224 = scmp.eq.s32.totalorder %s19, 0
    %p225 = por %p223, %p224
    %p226 = scmp.le.s32.totalorder 1, %s13
    %p227 = scmp.lt.s32.totalorder %s13, 5
    %p228 = pnand %p226, %p227
    %p229 = pneg %p228
    // Predicated region
    $region9: #{feed_forward_zipformer.1} parent=5 // pred_check
      _
    $region10: #{feed_forward_zipformer.1} parent=5 // pred_check_branch
      %231 = sbr.rel (%p228) target = $region12
    $region11: #{feed_forward_zipformer.1} parent=5 // pred_region
      %s232 = ssub.s32 %s13, 1
      // Predicated region
      $region13: #{feed_forward_zipformer.1} parent=11 // pred_check
        %p233 = pneg %p72
      $region14: #{feed_forward_zipformer.1} parent=11 // pred_check_branch
        %235 = sbr.rel (%p233) target = $region16
      $region15: #{feed_forward_zipformer.1} parent=11 // pred_region
        _
      $region16: #{feed_forward_zipformer.1} parent=11 // pred_fallthru
        _
      // Predicated region
      $region17: #{feed_forward_zipformer.1} parent=11 // pred_check
        %p236 = pneg %p93
      $region18: #{feed_forward_zipformer.1} parent=11 // pred_check_branch
        %238 = sbr.rel (%p236) target = $region20
      $region19: #{feed_forward_zipformer.1} parent=11 // pred_region
        _
      $region20: #{feed_forward_zipformer.1} parent=11 // pred_fallthru
        _
      // Predicated region
      $region21: #{feed_forward_zipformer.1} parent=11 // pred_check
        %p239 = pneg %p119
      $region22: #{feed_forward_zipformer.1} parent=11 // pred_check_branch
        %241 = sbr.rel (%p239) target = $region24
      $region23: #{feed_forward_zipformer.1} parent=11 // pred_region
        %s242 = smul.u32 2, %s23
        %p243 = scmp.lt.s32.totalorder %s242, 1
        %s244 = scalar_select %p243, %s242, 1
        %s245 = smul.addr %s244, 4
        %s246 = scalar_lea.vmem %s3, %s245
        %s247 = smul.u32 2, %s23
      $region24: #{feed_forward_zipformer.1} parent=11 // pred_fallthru
        _
      // Predicated region
      $region25: #{feed_forward_zipformer.1} parent=11 // pred_check
        %p248 = pneg %p145
      $region26: #{feed_forward_zipformer.1} parent=11 // pred_check_branch
        %250 = sbr.rel (%p248) target = $region28
      $region27: #{feed_forward_zipformer.1} parent=11 // pred_region
        %s251 = smul.u32 2, %s23
        %p252 = scmp.lt.s32.totalorder %s251, 1
        %s253 = scalar_select %p252, %s251, 1
        %s254 = scalar_lea.vmem %s4, %s253
        %s255 = smul.u32 2, %s23
      $region28: #{feed_forward_zipformer.1} parent=11 // pred_fallthru
        _
      // Predicated region
      $region29: #{feed_forward_zipformer.1} parent=11 // pred_check
        %p256 = pneg %p171
      $region30: #{feed_forward_zipformer.1} parent=11 // pred_check_branch
        %258 = sbr.rel (%p256) target = $region32
      $region31: #{feed_forward_zipformer.1} parent=11 // pred_region
        %s259 = smul.u32 32, %s23
        %p260 = scmp.lt.s32.totalorder %s259, 31
        %s261 = scalar_select %p260, %s259, 31
        %s262 = smul.addr %s261, 4
        %s263 = scalar_lea.vmem %s5, %s262
        %s264 = smul.u32 32, %s23
      $region32: #{feed_forward_zipformer.1} parent=11 // pred_fallthru
        _
      // Predicated region
      $region33: #{feed_forward_zipformer.1} parent=11 // pred_check
        %p265 = pneg %p192
      $region34: #{feed_forward_zipformer.1} parent=11 // pred_check_branch
        %267 = sbr.rel (%p265) target = $region36
      $region35: #{feed_forward_zipformer.1} parent=11 // pred_region
        _
      $region36: #{feed_forward_zipformer.1} parent=11 // pred_fallthru
        _
    $region12: #{feed_forward_zipformer.1} parent=5 // pred_fallthru
      _
    %p268 = scmp.lt.s32.totalorder %s13, 4
    // Predicated region
    $region37: #{feed_forward_zipformer.1} parent=5 // pred_check
      %p269 = pneg %p268
    $region38: #{feed_forward_zipformer.1} parent=5 // pred_check_branch
      %271 = sbr.rel (%p269) target = $region40
    $region39: #{feed_forward_zipformer.1} parent=5 // pred_region
      // Predicated region
      $region41: #{feed_forward_zipformer.1} parent=39 // pred_check
        %p272 = pneg %p45
      $region42: #{feed_forward_zipformer.1} parent=39 // pred_check_branch
        %274 = sbr.rel (%p272) target = $region44
      $region43: #{feed_forward_zipformer.1} parent=39 // pred_region
        %s275 = smul.u32 4, %s20
        %p276 = scmp.lt.s32.totalorder %s275, 15
        %s277 = scalar_select %p276, %s275, 15
        %s278 = smul.addr %s277, 8
        %s279 = scalar_lea.vmem %s0, %s278
        %s280 = smul.u32 4, %s20
      $region44: #{feed_forward_zipformer.1} parent=39 // pred_fallthru
        _
    $region40: #{feed_forward_zipformer.1} parent=5 // pred_fallthru
      _
    %p281 = scmp.le.s32.totalorder 1, %s13
    %p282 = scmp.lt.s32.totalorder %s13, 5
    %p283 = pnand %p281, %p282
    %p284 = pneg %p283
    // Predicated region
    $region45: #{feed_forward_zipformer.1} parent=5 // pred_check
      _
    $region46: #{feed_forward_zipformer.1} parent=5 // pred_check_branch
      %286 = sbr.rel (%p283) target = $region48
    $region47: #{feed_forward_zipformer.1} parent=5 // pred_region
      %s287 = ssub.s32 %s13, 1
      %s288 = smul.u32 4, %s22
      %p289 = scmp.lt.s32.totalorder %s288, 15
      %s290 = scalar_select %p289, %s288, 15
      %s291 = smul.addr %s290, 8
      %s292 = scalar_lea.vmem %s0, %s291
      %p293 = pneg %p51
      %p294 = pneg %p48
      %p295 = pneg %p72
      %p296 = pneg %p69
      %p297 = pneg %p93
      %p298 = pneg %p90
      %s299 = smul.u32 2, %s23
      %p300 = scmp.lt.s32.totalorder %s299, 1
      %s301 = scalar_select %p300, %s299, 1
      %s302 = smul.addr %s301, 4
      %s303 = scalar_lea.vmem %s3, %s302
      %p304 = pneg %p119
      %p305 = pneg %p116
      %s306 = smul.u32 2, %s23
      %p307 = scmp.lt.s32.totalorder %s306, 1
      %s308 = scalar_select %p307, %s306, 1
      %s309 = scalar_lea.vmem %s4, %s308
      %p310 = pneg %p145
      %p311 = pneg %p142
      %s312 = smul.u32 32, %s23
      %p313 = scmp.lt.s32.totalorder %s312, 31
      %s314 = scalar_select %p313, %s312, 31
      %s315 = smul.addr %s314, 4
      %s316 = scalar_lea.vmem %s5, %s315
      %p317 = pneg %p171
      %p318 = pneg %p168
      %p319 = pneg %p192
      %p320 = pneg %p189
      %p321 = pneg %p218
      %p322 = pneg %p215
      %s323 = smul.u32 4, %s22
      %p324 = scmp.lt.s32.totalorder %s323, 15
      %s325 = scalar_select %p324, %s323, 15
      %s326 = smul.addr %s325, 8
      %s327 = scalar_lea.vmem %s7, %s326
      %s328 = smul.u32 4, %s22
      %p329 = scmp.lt.s32.totalorder %s328, 15
      %s330 = scalar_select %p329, %s328, 15
      %s331 = smul.addr %s330, 8
      %s332 = scalar_lea.vmem %s0, %s331
      %s333 = smul.u32 4, %s22
      %s334 = smul.u32 2, %s23
      %p335 = scmp.lt.s32.totalorder %s334, 1
      %s336 = scalar_select %p335, %s334, 1
      %s337 = smul.addr %s336, 4
      %s338 = scalar_lea.vmem %s3, %s337
      %s339 = smul.u32 2, %s23
      %s340 = smul.u32 2, %s23
      %p341 = scmp.lt.s32.totalorder %s340, 1
      %s342 = scalar_select %p341, %s340, 1
      %s343 = scalar_lea.vmem %s4, %s342
      %s344 = smul.u32 2, %s23
      %s345 = smul.u32 32, %s23
      %p346 = scmp.lt.s32.totalorder %s345, 31
      %s347 = scalar_select %p346, %s345, 31
      %s348 = smul.addr %s347, 4
      %s349 = scalar_lea.vmem %s5, %s348
      %s350 = smul.u32 32, %s23
      %s351 = smul.u32 4, %s22
      %p352 = scmp.lt.s32.totalorder %s351, 15
      %s353 = scalar_select %p352, %s351, 15
      %s354 = smul.addr %s353, 8
      %s355 = scalar_lea.vmem %s7, %s354
      %s356 = smul.u32 4, %s22
      %p358 = scmp.eq.s32.totalorder %s23, 0
      // Predicated region
      $region49: #{feed_forward_zipformer.1} parent=47 // pred_check
        %p359 = pneg %p358
      $region50: #{feed_forward_zipformer.1} parent=47 // pred_check_branch
        %361 = sbr.rel (%p359) target = $region52
      $region51: #{feed_forward_zipformer.1} parent=47 // pred_region
        %v362 = vld [vmem:[%s332] sm:$0xff]
        %v363 = vld [vmem:[%s332 + $0x8] sm:$0xff]
        %v364 = vld [vmem:[%s332 + $0x10] sm:$0xff]
        %v365 = vld [vmem:[%s332 + $0x18] sm:$0xff]
        %366 = vadd.xlane.f32.xlu0 %v362
        %v367 = vpop.xlane.xlu0 %366
        %368 = vadd.xlane.f32.xlu0 %v363
        %v369 = vpop.xlane.xlu0 %368
        %370 = vadd.xlane.f32.xlu0 %v364
        %v371 = vpop.xlane.xlu0 %370
        %372 = vadd.xlane.f32.xlu0 %v365
        %v373 = vpop.xlane.xlu0 %372
        %v374 = vrcp.pop 128.0
        %v375 = vmul.f32 %v367, %v374
        %v376 = vmul.f32 %v369, %v374
        %v377 = vmul.f32 %v371, %v374
        %v378 = vmul.f32 %v373, %v374
        %v379 = vsub.f32 %v362, %v375
        %v380 = vsub.f32 %v363, %v376
        %v381 = vsub.f32 %v364, %v377
        %v382 = vsub.f32 %v365, %v378
        %v383 = vmul.f32 %v379, %v379
        %v384 = vmul.f32 %v380, %v380
        %v385 = vmul.f32 %v381, %v381
        %v386 = vmul.f32 %v382, %v382
        %387 = vadd.xlane.f32.xlu0 %v383
        %v388 = vpop.xlane.xlu0 %387
        %389 = vadd.xlane.f32.xlu0 %v384
        %v390 = vpop.xlane.xlu0 %389
        %391 = vadd.xlane.f32.xlu0 %v385
        %v392 = vpop.xlane.xlu0 %391
        %393 = vadd.xlane.f32.xlu0 %v386
        %v394 = vpop.xlane.xlu0 %393
        %v395 = vmul.f32 %v388, %v374
        %v396 = vmul.f32 %v390, %v374
        %v397 = vmul.f32 %v392, %v374
        %v398 = vmul.f32 %v394, %v374
        %v399 = vadd.f32 %v395, 1e-05
        %v400 = vadd.f32 %v396, 1e-05
        %v401 = vadd.f32 %v397, 1e-05
        %v402 = vadd.f32 %v398, 1e-05
        %v403 = vrsqrt.pop %v399
        %v404 = vrsqrt.pop %v400
        %v405 = vrsqrt.pop %v401
        %v406 = vrsqrt.pop %v402
        %v407 = vmul.f32 %v379, %v403
        %v408 = vmul.f32 %v380, %v404
        %v409 = vmul.f32 %v381, %v405
        %v410 = vmul.f32 %v382, %v406
        %v411 = vld [vmem:[%s1] sm:$0x1]
        %v413 = vlaneseq
        %v414 = vshrl.u32 %v413, 7
        %v415 = vsub.s32 0, %v414
        %v416 = vrot.slane %v411, %v415
        %v418 = vmul.f32 %v407, %v416
        %v419 = vmul.f32 %v408, %v416
        %v420 = vmul.f32 %v409, %v416
        %v421 = vmul.f32 %v410, %v416
        %v422 = vld [vmem:[%s2] sm:$0x1]
        %v424 = vlaneseq
        %v425 = vshrl.u32 %v424, 7
        %v426 = vsub.s32 0, %v425
        %v427 = vrot.slane %v422, %v426
        %v429 = vadd.f32 %v418, %v427
        %v430 = vadd.f32 %v419, %v427
        %v431 = vadd.f32 %v420, %v427
        %v432 = vadd.f32 %v421, %v427
        %v433 = vpack.c.bf16 %v430, %v429
        %v434 = vpack.c.bf16 %v432, %v431
        %v437 = vunpack.c.l.b16 %v433
        %v438 = vunpack.c.h.b16 %v433
        %v439 = vunpack.c.l.b16 %v434
        %v440 = vunpack.c.h.b16 %v434
        %v441 = vpack.c.b16 %v437, %v437
        %v442 = vpack.c.b16 %v438, %v438
        %v443 = vpack.c.b16 %v439, %v439
        %v444 = vpack.c.b16 %v440, %v440
        %449 = vst [vmem:[#allocation2] sm:$0xf] %v441
        %450 = vst [vmem:[#allocation2 + $0x4] sm:$0xf] %v442
        %451 = vst [vmem:[#allocation2 + $0x8] sm:$0xf] %v443
        %452 = vst [vmem:[#allocation2 + $0xc] sm:$0xf] %v444
        %453 = vst [vmem:[#allocation3] sm:$0xff] 0.0
        %454 = vst [vmem:[#allocation3 + $0x8] sm:$0xff] 0.0
        %455 = vst [vmem:[#allocation3 + $0x10] sm:$0xff] 0.0
        %456 = vst [vmem:[#allocation3 + $0x18] sm:$0xff] 0.0
      $region52: #{feed_forward_zipformer.1} parent=47 // pred_fallthru
        _
      %v457 = vld [vmem:[#allocation2] sm:$0xf]
      %v458 = vld [vmem:[#allocation2 + $0x4] sm:$0xf]
      %v459 = vld [vmem:[#allocation2 + $0x8] sm:$0xf]
      %v460 = vld [vmem:[#allocation2 + $0xc] sm:$0xf]
      %v461 = vld [vmem:[%s338] sm:$0xff]
      %v462 = vld [vmem:[%s338 + $0x8] sm:$0xff]
      %v463 = vld [vmem:[%s338 + $0x10] sm:$0xff]
      %v464 = vld [vmem:[%s338 + $0x18] sm:$0xff]
      %v465 = vld [vmem:[%s338 + $0x20] sm:$0xff]
      %v466 = vld [vmem:[%s338 + $0x28] sm:$0xff]
      %v467 = vld [vmem:[%s338 + $0x30] sm:$0xff]
      %v468 = vld [vmem:[%s338 + $0x38] sm:$0xff]
      %v469 = vld [vmem:[%s338 + $0x40] sm:$0xff]
      %v470 = vld [vmem:[%s338 + $0x48] sm:$0xff]
      %v471 = vld [vmem:[%s338 + $0x50] sm:$0xff]
      %v472 = vld [vmem:[%s338 + $0x58] sm:$0xff]
      %v473 = vld [vmem:[%s338 + $0x60] sm:$0xff]
      %v474 = vld [vmem:[%s338 + $0x68] sm:$0xff]
      %v475 = vld [vmem:[%s338 + $0x70] sm:$0xff]
      %v476 = vld [vmem:[%s338 + $0x78] sm:$0xff]
      %v477 = vld [vmem:[%s343] sm:$0x3]
      %v479 = vlaneseq
      %v480 = vshrl.u32 %v479, 7
      %v481 = vsub.s32 0, %v480
      %v482 = vrot.slane %v477, %v481
      %v483 = vlaneseq
      %v484 = vshrl.u32 %v483, 7
      %v485 = vsub.s32 1, %v484
      %v486 = vrot.slane %v477, %v485
      %v493 = vunpack.c.l.b16 %v457
      %v494 = vunpack.c.l.b16 %v458
      %v495 = vunpack.c.l.b16 %v459
      %v496 = vunpack.c.l.b16 %v460
      %v497 = vpack.c.b16 %v494, %v493
      %v498 = vpack.c.b16 %v496, %v495
      %v517 = vunpack.c.l.b16 %v461
      %v518 = vunpack.c.h.b16 %v461
      %v519 = vunpack.c.l.b16 %v462
      %v520 = vunpack.c.h.b16 %v462
      %v521 = vunpack.c.l.b16 %v463
      %v522 = vunpack.c.h.b16 %v463
      %v523 = vunpack.c.l.b16 %v464
      %v524 = vunpack.c.h.b16 %v464
      %v525 = vunpack.c.l.b16 %v465
      %v526 = vunpack.c.h.b16 %v465
      %v527 = vunpack.c.l.b16 %v466
      %v528 = vunpack.c.h.b16 %v466
      %v529 = vunpack.c.l.b16 %v467
      %v530 = vunpack.c.h.b16 %v467
      %v531 = vunpack.c.l.b16 %v468
      %v532 = vunpack.c.h.b16 %v468
      %v533 = vunpack.c.l.b16 %v469
      %v534 = vunpack.c.h.b16 %v469
      %v535 = vunpack.c.l.b16 %v470
      %v536 = vunpack.c.h.b16 %v470
      %v537 = vunpack.c.l.b16 %v471
      %v538 = vunpack.c.h.b16 %v471
      %v539 = vunpack.c.l.b16 %v472
      %v540 = vunpack.c.h.b16 %v472
      %v541 = vunpack.c.l.b16 %v473
      %v542 = vunpack.c.h.b16 %v473
      %v543 = vunpack.c.l.b16 %v474
      %v544 = vunpack.c.h.b16 %v474
      %v545 = vunpack.c.l.b16 %v475
      %v546 = vunpack.c.h.b16 %v475
      %v547 = vunpack.c.l.b16 %v476
      %v548 = vunpack.c.h.b16 %v476
      %v549 = vpack.c.b16 %v519, %v517
      %v550 = vpack.c.b16 %v520, %v518
      %v551 = vpack.c.b16 %v523, %v521
      %v552 = vpack.c.b16 %v524, %v522
      %v553 = vpack.c.b16 %v527, %v525
      %v554 = vpack.c.b16 %v528, %v526
      %v555 = vpack.c.b16 %v531, %v529
      %v556 = vpack.c.b16 %v532, %v530
      %v557 = vpack.c.b16 %v535, %v533
      %v558 = vpack.c.b16 %v536, %v534
      %v559 = vpack.c.b16 %v539, %v537
      %v560 = vpack.c.b16 %v540, %v538
      %v561 = vpack.c.b16 %v543, %v541
      %v562 = vpack.c.b16 %v544, %v542
      %v563 = vpack.c.b16 %v547, %v545
      %v564 = vpack.c.b16 %v548, %v546
      %581 = vmatprep.subr.bf16.mxu0 %v564
      %582 = vmatpush1.bf16.msra.mxu0 %v563
      %583 = vmatprep.subr.bf16.mxu0 %v562
      %584 = vmatpush1.bf16.msra.mxu0 %v561
      %585 = vmatprep.subr.bf16.mxu0 %v560
      %586 = vmatpush1.bf16.msra.mxu0 %v559
      %587 = vmatprep.subr.bf16.mxu0 %v558
      %588 = vmatpush1.bf16.msra.mxu0 %v557
      %589 = vmatprep.subr.bf16.mxu0 %v556
      %590 = vmatpush1.bf16.msra.mxu0 %v555
      %591 = vmatprep.subr.bf16.mxu0 %v554
      %592 = vmatpush1.bf16.msra.mxu0 %v553
      %593 = vmatprep.subr.bf16.mxu0 %v552
      %594 = vmatpush1.bf16.msra.mxu0 %v551
      %595 = vmatprep.subr.bf16.mxu0 %v550
      %596 = vmatpush1.bf16.msra.mxu0 %v549
      %597 = vmatprep.subr.bf16.mxu0 0
      %598 = vmatpush2.bf16.msra.mxu0 0
      %599 = vmatprep.subr.bf16.mxu0 0
      %600 = vmatpush2.bf16.msra.mxu0 0
      %601 = vmatprep.subr.bf16.mxu0 0
      %602 = vmatpush2.bf16.msra.mxu0 0
      %603 = vmatprep.subr.bf16.mxu0 0
      %604 = vmatpush2.bf16.msra.mxu0 0
      %605 = vmatprep.subr.bf16.mxu0 0
      %606 = vmatpush2.bf16.msra.mxu0 0
      %607 = vmatprep.subr.bf16.mxu0 0
      %608 = vmatpush2.bf16.msra.mxu0 0
      %609 = vmatprep.subr.bf16.mxu0 0
      %610 = vmatpush2.bf16.msra.mxu0 0
      %611 = vmatprep.subr.bf16.mxu0 0
      %612 = vmatpush2.bf16.msra.mxu0 0
      %613 = vmatprep.mubr.bf16.mxu0 0
      %614 = vmatmul.mubr.bf16.gmra.mxu0 %v497
      %v615 = vpop.f32.mrf.mxu0
      %v616 = vadd.f32 %v482, %v615
      %v617 = vpop.f32.mrf.mxu0
      %v618 = vadd.f32 %v486, %v617
      %v619 = vpop.f32.mrf.mxu0
      %v620 = vadd.f32 %v482, %v619
      %v621 = vpop.f32.mrf.mxu0
      %v622 = vadd.f32 %v486, %v621
      %623 = vmatprep.mubr.bf16.mxu0 0
      %624 = vmatmul.mubr.bf16.gmra.mxu0 %v498
      %v625 = vpop.f32.mrf.mxu0
      %v626 = vadd.f32 %v482, %v625
      %v627 = vpop.f32.mrf.mxu0
      %v628 = vadd.f32 %v486, %v627
      %v629 = vpop.f32.mrf.mxu0
      %v630 = vadd.f32 %v482, %v629
      %v631 = vpop.f32.mrf.mxu0
      %v632 = vadd.f32 %v486, %v631
      %633 = vdwg.mxu0
      %v634 = vxor.u32 %v616, 2147483648
      %v635 = vxor.u32 %v618, 2147483648
      %v636 = vxor.u32 %v620, 2147483648
      %v637 = vxor.u32 %v622, 2147483648
      %v638 = vxor.u32 %v626, 2147483648
      %v639 = vxor.u32 %v628, 2147483648
      %v640 = vxor.u32 %v630, 2147483648
      %v641 = vxor.u32 %v632, 2147483648
      %v642 = vmul.f32 %v634, 1.442695
      %v643 = vpow.pop %v642
      %v644 = vmul.f32 %v635, 1.442695
      %v645 = vpow.pop %v644
      %v646 = vmul.f32 %v636, 1.442695
      %v647 = vpow.pop %v646
      %v648 = vmul.f32 %v637, 1.442695
      %v649 = vpow.pop %v648
      %v650 = vmul.f32 %v638, 1.442695
      %v651 = vpow.pop %v650
      %v652 = vmul.f32 %v639, 1.442695
      %v653 = vpow.pop %v652
      %v654 = vmul.f32 %v640, 1.442695
      %v655 = vpow.pop %v654
      %v656 = vmul.f32 %v641, 1.442695
      %v657 = vpow.pop %v656
      %v658 = vadd.f32 %v643, 1.0
      %v659 = vadd.f32 %v645, 1.0
      %v660 = vadd.f32 %v647, 1.0
      %v661 = vadd.f32 %v649, 1.0
      %v662 = vadd.f32 %v651, 1.0
      %v663 = vadd.f32 %v653, 1.0
      %v664 = vadd.f32 %v655, 1.0
      %v665 = vadd.f32 %v657, 1.0
      %v666 = vrcp.pop %v658
      %v667 = vmul.f32 1.0, %v666
      %v668 = vrcp.pop %v659
      %v669 = vmul.f32 1.0, %v668
      %v670 = vrcp.pop %v660
      %v671 = vmul.f32 1.0, %v670
      %v672 = vrcp.pop %v661
      %v673 = vmul.f32 1.0, %v672
      %v674 = vrcp.pop %v662
      %v675 = vmul.f32 1.0, %v674
      %v676 = vrcp.pop %v663
      %v677 = vmul.f32 1.0, %v676
      %v678 = vrcp.pop %v664
      %v679 = vmul.f32 1.0, %v678
      %v680 = vrcp.pop %v665
      %v681 = vmul.f32 1.0, %v680
      %v682 = vmul.f32 %v616, %v667
      %v683 = vmul.f32 %v618, %v669
      %v684 = vmul.f32 %v620, %v671
      %v685 = vmul.f32 %v622, %v673
      %v686 = vmul.f32 %v626, %v675
      %v687 = vmul.f32 %v628, %v677
      %v688 = vmul.f32 %v630, %v679
      %v689 = vmul.f32 %v632, %v681
      %v690 = vld [vmem:[#allocation3] sm:$0xff]
      %v691 = vld [vmem:[#allocation3 + $0x8] sm:$0xff]
      %v692 = vld [vmem:[#allocation3 + $0x10] sm:$0xff]
      %v693 = vld [vmem:[#allocation3 + $0x18] sm:$0xff]
      %v694 = vpack.c.bf16 %v684, %v682
      %v695 = vpack.c.bf16 %v685, %v683
      %v696 = vpack.c.bf16 %v688, %v686
      %v697 = vpack.c.bf16 %v689, %v687
      %v698 = vld [vmem:[%s349] sm:$0xf]
      %v699 = vld [vmem:[%s349 + $0x4] sm:$0xf]
      %v700 = vld [vmem:[%s349 + $0x8] sm:$0xf]
      %v701 = vld [vmem:[%s349 + $0xc] sm:$0xf]
      %v702 = vld [vmem:[%s349 + $0x10] sm:$0xf]
      %v703 = vld [vmem:[%s349 + $0x14] sm:$0xf]
      %v704 = vld [vmem:[%s349 + $0x18] sm:$0xf]
      %v705 = vld [vmem:[%s349 + $0x1c] sm:$0xf]
      %v706 = vld [vmem:[%s349 + $0x20] sm:$0xf]
      %v707 = vld [vmem:[%s349 + $0x24] sm:$0xf]
      %v708 = vld [vmem:[%s349 + $0x28] sm:$0xf]
      %v709 = vld [vmem:[%s349 + $0x2c] sm:$0xf]
      %v710 = vld [vmem:[%s349 + $0x30] sm:$0xf]
      %v711 = vld [vmem:[%s349 + $0x34] sm:$0xf]
      %v712 = vld [vmem:[%s349 + $0x38] sm:$0xf]
      %v713 = vld [vmem:[%s349 + $0x3c] sm:$0xf]
      %v714 = vld [vmem:[%s349 + $0x40] sm:$0xf]
      %v715 = vld [vmem:[%s349 + $0x44] sm:$0xf]
      %v716 = vld [vmem:[%s349 + $0x48] sm:$0xf]
      %v717 = vld [vmem:[%s349 + $0x4c] sm:$0xf]
      %v718 = vld [vmem:[%s349 + $0x50] sm:$0xf]
      %v719 = vld [vmem:[%s349 + $0x54] sm:$0xf]
      %v720 = vld [vmem:[%s349 + $0x58] sm:$0xf]
      %v721 = vld [vmem:[%s349 + $0x5c] sm:$0xf]
      %v722 = vld [vmem:[%s349 + $0x60] sm:$0xf]
      %v723 = vld [vmem:[%s349 + $0x64] sm:$0xf]
      %v724 = vld [vmem:[%s349 + $0x68] sm:$0xf]
      %v725 = vld [vmem:[%s349 + $0x6c] sm:$0xf]
      %v726 = vld [vmem:[%s349 + $0x70] sm:$0xf]
      %v727 = vld [vmem:[%s349 + $0x74] sm:$0xf]
      %v728 = vld [vmem:[%s349 + $0x78] sm:$0xf]
      %v729 = vld [vmem:[%s349 + $0x7c] sm:$0xf]
      %v762 = vunpack.c.l.b16 %v698
      %v763 = vunpack.c.l.b16 %v699
      %v764 = vunpack.c.l.b16 %v700
      %v765 = vunpack.c.l.b16 %v701
      %v766 = vunpack.c.l.b16 %v702
      %v767 = vunpack.c.l.b16 %v703
      %v768 = vunpack.c.l.b16 %v704
      %v769 = vunpack.c.l.b16 %v705
      %v770 = vunpack.c.l.b16 %v706
      %v771 = vunpack.c.l.b16 %v707
      %v772 = vunpack.c.l.b16 %v708
      %v773 = vunpack.c.l.b16 %v709
      %v774 = vunpack.c.l.b16 %v710
      %v775 = vunpack.c.l.b16 %v711
      %v776 = vunpack.c.l.b16 %v712
      %v777 = vunpack.c.l.b16 %v713
      %v778 = vunpack.c.l.b16 %v714
      %v779 = vunpack.c.l.b16 %v715
      %v780 = vunpack.c.l.b16 %v716
      %v781 = vunpack.c.l.b16 %v717
      %v782 = vunpack.c.l.b16 %v718
      %v783 = vunpack.c.l.b16 %v719
      %v784 = vunpack.c.l.b16 %v720
      %v785 = vunpack.c.l.b16 %v721
      %v786 = vunpack.c.l.b16 %v722
      %v787 = vunpack.c.l.b16 %v723
      %v788 = vunpack.c.l.b16 %v724
      %v789 = vunpack.c.l.b16 %v725
      %v790 = vunpack.c.l.b16 %v726
      %v791 = vunpack.c.l.b16 %v727
      %v792 = vunpack.c.l.b16 %v728
      %v793 = vunpack.c.l.b16 %v729
      %v794 = vpack.c.b16 %v763, %v762
      %v795 = vpack.c.b16 %v765, %v764
      %v796 = vpack.c.b16 %v767, %v766
      %v797 = vpack.c.b16 %v769, %v768
      %v798 = vpack.c.b16 %v771, %v770
      %v799 = vpack.c.b16 %v773, %v772
      %v800 = vpack.c.b16 %v775, %v774
      %v801 = vpack.c.b16 %v777, %v776
      %v802 = vpack.c.b16 %v779, %v778
      %v803 = vpack.c.b16 %v781, %v780
      %v804 = vpack.c.b16 %v783, %v782
      %v805 = vpack.c.b16 %v785, %v784
      %v806 = vpack.c.b16 %v787, %v786
      %v807 = vpack.c.b16 %v789, %v788
      %v808 = vpack.c.b16 %v791, %v790
      %v809 = vpack.c.b16 %v793, %v792
      %826 = vmatprep.subr.bf16.mxu0 0
      %827 = vmatpush1.bf16.msra.mxu0 %v801
      %828 = vmatprep.subr.bf16.mxu0 0
      %829 = vmatpush1.bf16.msra.mxu0 %v800
      %830 = vmatprep.subr.bf16.mxu0 0
      %831 = vmatpush1.bf16.msra.mxu0 %v799
      %832 = vmatprep.subr.bf16.mxu0 0
      %833 = vmatpush1.bf16.msra.mxu0 %v798
      %834 = vmatprep.subr.bf16.mxu0 0
      %835 = vmatpush1.bf16.msra.mxu0 %v797
      %836 = vmatprep.subr.bf16.mxu0 0
      %837 = vmatpush1.bf16.msra.mxu0 %v796
      %838 = vmatprep.subr.bf16.mxu0 0
      %839 = vmatpush1.bf16.msra.mxu0 %v795
      %840 = vmatprep.subr.bf16.mxu0 0
      %841 = vmatpush1.bf16.msra.mxu0 %v794
      %842 = vmatprep.subr.bf16.mxu0 0
      %843 = vmatpush2.bf16.msra.mxu0 %v809
      %844 = vmatprep.subr.bf16.mxu0 0
      %845 = vmatpush2.bf16.msra.mxu0 %v808
      %846 = vmatprep.subr.bf16.mxu0 0
      %847 = vmatpush2.bf16.msra.mxu0 %v807
      %848 = vmatprep.subr.bf16.mxu0 0
      %849 = vmatpush2.bf16.msra.mxu0 %v806
      %850 = vmatprep.subr.bf16.mxu0 0
      %851 = vmatpush2.bf16.msra.mxu0 %v805
      %852 = vmatprep.subr.bf16.mxu0 0
      %853 = vmatpush2.bf16.msra.mxu0 %v804
      %854 = vmatprep.subr.bf16.mxu0 0
      %855 = vmatpush2.bf16.msra.mxu0 %v803
      %856 = vmatprep.subr.bf16.mxu0 0
      %857 = vmatpush2.bf16.msra.mxu0 %v802
      %858 = vmatprep.mubr.bf16.mxu0 %v695
      %859 = vmatmul.mubr.bf16.gmra.mxu0 %v694
      %v860 = vpop.f32.mrf.mxu0
      %v861 = vadd.f32 0.0, %v860
      %v862 = vpop.f32.mrf.mxu0
      %v863 = vpop.f32.mrf.mxu0
      %v864 = vadd.f32 0.0, %v863
      %v865 = vpop.f32.mrf.mxu0
      %866 = vmatprep.mubr.bf16.mxu0 %v697
      %867 = vmatmul.mubr.bf16.gmra.mxu0 %v696
      %v868 = vpop.f32.mrf.mxu0
      %v869 = vadd.f32 0.0, %v868
      %v870 = vpop.f32.mrf.mxu0
      %v871 = vpop.f32.mrf.mxu0
      %v872 = vadd.f32 0.0, %v871
      %v873 = vpop.f32.mrf.mxu0
      %874 = vdwg.mxu0
      %v875 = vadd.f32 %v690, %v861
      %v876 = vadd.f32 %v691, %v864
      %v877 = vadd.f32 %v692, %v869
      %v878 = vadd.f32 %v693, %v872
      %879 = vst [vmem:[#allocation3] sm:$0xff] %v875
      %880 = vst [vmem:[#allocation3 + $0x8] sm:$0xff] %v876
      %881 = vst [vmem:[#allocation3 + $0x10] sm:$0xff] %v877
      %882 = vst [vmem:[#allocation3 + $0x18] sm:$0xff] %v878
      // Predicated region
      $region53: #{feed_forward_zipformer.1} parent=47 // pred_check
        %p883 = pneg %p358
      $region54: #{feed_forward_zipformer.1} parent=47 // pred_check_branch
        %885 = sbr.rel (%p883) target = $region56
      $region55: #{feed_forward_zipformer.1} parent=47 // pred_region
        %v886 = vld [vmem:[#allocation3] sm:$0xff]
        %v887 = vld [vmem:[#allocation3 + $0x8] sm:$0xff]
        %v888 = vld [vmem:[#allocation3 + $0x10] sm:$0xff]
        %v889 = vld [vmem:[#allocation3 + $0x18] sm:$0xff]
        %v890 = vld [vmem:[%s6] sm:$0x1]
        %v892 = vlaneseq
        %v893 = vshrl.u32 %v892, 7
        %v894 = vsub.s32 0, %v893
        %v895 = vrot.slane %v890, %v894
        %v897 = vadd.f32 %v886, %v895
        %v898 = vadd.f32 %v887, %v895
        %v899 = vadd.f32 %v888, %v895
        %v900 = vadd.f32 %v889, %v895
        %901 = vst [vmem:[%s355] sm:$0xff] %v897
        %902 = vst [vmem:[%s355 + $0x8] sm:$0xff] %v898
        %903 = vst [vmem:[%s355 + $0x10] sm:$0xff] %v899
        %904 = vst [vmem:[%s355 + $0x18] sm:$0xff] %v900
      $region56: #{feed_forward_zipformer.1} parent=47 // pred_fallthru
        _
      %s905 = smul.u32 4, %s22
      %p906 = scmp.lt.s32.totalorder %s905, 15
      %s907 = scalar_select %p906, %s905, 15
      %s908 = smul.addr %s907, 8
      %s909 = scalar_lea.vmem %s7, %s908
      // Predicated region
      $region57: #{feed_forward_zipformer.1} parent=47 // pred_check
        %p910 = pneg %p215
      $region58: #{feed_forward_zipformer.1} parent=47 // pred_check_branch
        %912 = sbr.rel (%p910) target = $region60
      $region59: #{feed_forward_zipformer.1} parent=47 // pred_region
        %s913 = smul.u32 4, %s22
      $region60: #{feed_forward_zipformer.1} parent=47 // pred_fallthru
        _
    $region48: #{feed_forward_zipformer.1} parent=5 // pred_fallthru
      _
    %p914 = scmp.le.s32.totalorder 2, %s13
    // Predicated region
    $region61: #{feed_forward_zipformer.1} parent=5 // pred_check
      %p915 = pneg %p914
    $region62: #{feed_forward_zipformer.1} parent=5 // pred_check_branch
      %917 = sbr.rel (%p915) target = $region64
    $region63: #{feed_forward_zipformer.1} parent=5 // pred_region
      %s918 = ssub.s32 %s13, 2
      // Predicated region
      $region65: #{feed_forward_zipformer.1} parent=63 // pred_check
        %p919 = pneg %p221
      $region66: #{feed_forward_zipformer.1} parent=63 // pred_check_branch
        %921 = sbr.rel (%p919) target = $region68
      $region67: #{feed_forward_zipformer.1} parent=63 // pred_region
        %s922 = smul.u32 4, %s24
        %p923 = scmp.lt.s32.totalorder %s922, 15
        %s924 = scalar_select %p923, %s922, 15
        %s925 = smul.addr %s924, 8
        %s926 = scalar_lea.vmem %s7, %s925
      $region68: #{feed_forward_zipformer.1} parent=63 // pred_fallthru
        _
    $region64: #{feed_forward_zipformer.1} parent=5 // pred_fallthru
      _
  $region6: #{feed_forward_zipformer.1} parent=0 // loop_footer
    %s17 = sadd.s32 1, %s13
  $region7: #{feed_forward_zipformer.1} parent=0 // loop_footer_branch
    %12 = sbr.rel target = $region3
  $region8: #{feed_forward_zipformer.1} parent=0 // loop_exit
    _

</llo_original>
